<compile_context>
chip_gen: v5e
topology: v5e:2x2
jax: 0.10.0
libtpu: 0.0.40
codegen_flags: <defaults>
</compile_context>

<pallas_src>
import functools

import jax
import jax.numpy as jnp
from jax import lax
from jax.experimental import pallas as pl
from jax.experimental.pallas import tpu as pltpu

_LANE = 128        # last-dim alignment for BlockSpec tiles
_SUBLANE = 8       # second-to-last-dim alignment
_MIN_VMEM = 32 * 1024 * 1024
_MAX_VMEM = 64 * 1024 * 1024   # keep requests <= v7x physical VMEM


def _tile(dim, pref, align):
    """Largest divisor of `dim` that is <= `pref` and a multiple of `align`.

    Falls back to the full `dim` (always a legal block) if no aligned divisor
    exists or if dim <= pref.
    """
    if dim <= pref:
        return dim
    t = (pref // align) * align
    while t >= align:
        if dim % t == 0:
            return t
        t -= align
    # TODO(synk): zero-pad A / x at construction for awkward dims so the
    # kernel never falls back to a full-dim (tens-of-MiB) block.
    return dim


def _vmem_limit(block_bytes, scratch_bytes=0):
    """Scoped-VMEM request derived from the chosen tiles (double-buffered)."""
    need = 2 * block_bytes + scratch_bytes + (2 << 20)   # + headroom
    return int(min(max(need, _MIN_VMEM), _MAX_VMEM))


# ---------------------------------------------------------------------------
# Tiled matmul kernel (K-reduction last; bf16 operands, f32 accumulation).
# When the output dtype is f32 we accumulate directly into o_ref (resident
# across the K axis) and skip the VMEM scratch entirely.
# ---------------------------------------------------------------------------
def _matmul_kernel(x_ref, a_ref, o_ref, *acc, nt):
    """o += x @ a.T (nt=True) or x @ a (nt=False)."""
    acc_ref = acc[0] if acc else o_ref

    @pl.when(pl.program_id(2) == 0)
    def _():
        acc_ref[...] = jnp.zeros_like(acc_ref)

    xb = x_ref[...].astype(jnp.bfloat16)
    ab = a_ref[...].astype(jnp.bfloat16)           # no-op: A is stored bf16
    dn = (((1,), (1,)), ((), ())) if nt else (((1,), (0,)), ((), ()))
    acc_ref[...] += lax.dot_general(
        xb, ab, dimension_numbers=dn, preferred_element_type=jnp.float32)

    if acc:
        @pl.when(pl.program_id(2) == pl.num_programs(2) - 1)
        def _():
            o_ref[...] = acc_ref[...].astype(o_ref.dtype)


def _forward_impl(x, a):
    """y = x @ a.T with x:(M, K), a:(N, K) bf16  ->  (M, N) in x.dtype."""
    m, k = x.shape
    n, k2 = a.shape
    assert k == k2
    tm = _tile(m, 256, _SUBLANE)
    tn = _tile(n, 512, _LANE)
    tk = _tile(k, 1024, _LANE)
    grid = (m // tm, n // tn, k // tk)
    out_f32 = x.dtype == jnp.float32
    scratch = [] if out_f32 else [pltpu.VMEM((tm, tn), jnp.float32)]
    blk = (tm * tk * x.dtype.itemsize + tn * tk * a.dtype.itemsize
           + tm * tn * x.dtype.itemsize)
    return pl.pallas_call(
        functools.partial(_matmul_kernel, nt=True),
        out_shape=jax.ShapeDtypeStruct((m, n), x.dtype),
        grid=grid,
        in_specs=[
            pl.BlockSpec((tm, tk), lambda i, j, kk: (i, kk)),
            pl.BlockSpec((tn, tk), lambda i, j, kk: (j, kk)),
        ],
        out_specs=pl.BlockSpec((tm, tn), lambda i, j, kk: (i, j)),
        scratch_shapes=scratch,
        compiler_params=pltpu.CompilerParams(
            dimension_semantics=("parallel", "parallel", "arbitrary"),
            vmem_limit_bytes=_vmem_limit(blk, 0 if out_f32 else tm * tn * 4),
        ),
        cost_estimate=pl.CostEstimate(
            flops=2 * m * n * k,
            transcendentals=0,
            bytes_accessed=(n * k * a.dtype.itemsize * (m // tm)   # A re-read / i
                            + m * k * x.dtype.itemsize * (n // tn)  # x re-read / j
                            + m * n * x.dtype.itemsize),
        ),
    )(x, a)


def _adjoint_impl(y, a):
    """z = y @ a with y:(M, K), a:(K, N) bf16  ->  (M, N) in y.dtype."""
    m, k = y.shape
    k2, n = a.shape
    assert k == k2
    tm = _tile(m, 256, _SUBLANE)
    tn = _tile(n, 512, _LANE)
    tk = _tile(k, 1024, _LANE)
    grid = (m // tm, n // tn, k // tk)
    out_f32 = y.dtype == jnp.float32
    scratch = [] if out_f32 else [pltpu.VMEM((tm, tn), jnp.float32)]
    blk = (tm * tk * y.dtype.itemsize + tk * tn * a.dtype.itemsize
           + tm * tn * y.dtype.itemsize)
    return pl.pallas_call(
        functools.partial(_matmul_kernel, nt=False),
        out_shape=jax.ShapeDtypeStruct((m, n), y.dtype),
        grid=grid,
        in_specs=[
            pl.BlockSpec((tm, tk), lambda i, j, kk: (i, kk)),
            pl.BlockSpec((tk, tn), lambda i, j, kk: (kk, j)),
        ],
        out_specs=pl.BlockSpec((tm, tn), lambda i, j, kk: (i, j)),
        scratch_shapes=scratch,
        compiler_params=pltpu.CompilerParams(
            dimension_semantics=("parallel", "parallel", "arbitrary"),
            vmem_limit_bytes=_vmem_limit(blk, 0 if out_f32 else tm * tn * 4),
        ),
        cost_estimate=pl.CostEstimate(
            flops=2 * m * n * k,
            transcendentals=0,
            bytes_accessed=(k * n * a.dtype.itemsize * (m // tm)
                            + m * k * y.dtype.itemsize * (n // tn)
                            + m * n * y.dtype.itemsize),
        ),
    )(y, a)


# ---------------------------------------------------------------------------
# Fused gramian: z = (x @ A.T) @ A in ONE kernel; the intermediate y_d stays
# in registers/VMEM.  Grid = (batch tiles, model-column tiles, data tiles);
# the data axis is the (last, "arbitrary") reduction, the model-column axis
# is "parallel" so v7x megacore can shard it and VMEM no longer scales with
# n_model.
# ---------------------------------------------------------------------------
def _gramian_kernel(x_ref, a_full_ref, *rest, single_slice):
    if single_slice:
        a_slice_ref = a_full_ref          # one model tile: reuse the same block
        o_ref, *acc = rest
    else:
        a_slice_ref, o_ref, *acc = rest

    acc_ref = acc[0] if acc else o_ref
    d = pl.program_id(2)

    @pl.when(d == 0)
    def _():
        acc_ref[...] = jnp.zeros_like(acc_ref)

    xb = x_ref[...].astype(jnp.bfloat16)
    # y_d = x @ A_d.T : (tm, td).  Contract the last (n_model) dims of both
    # operands so no transposed copy of A is materialized in HBM.
    # TODO(synk): inspect the lowering for an XLU relayout of a_full_ref and
    # restructure if a per-step transpose shows up in the bundle dump.
    y = lax.dot_general(
        xb, a_full_ref[...].astype(jnp.bfloat16),
        dimension_numbers=(((1,), (1,)), ((), ())),
        preferred_element_type=jnp.float32)
    # acc += y_d @ A_d[:, jo-slice].  y is deliberately re-cast to bf16 so the
    # fused result matches the unfused adjoint(forward(x)) path with bf16 A.
    acc_ref[...] += jnp.dot(
        y.astype(jnp.bfloat16), a_slice_ref[...].astype(jnp.bfloat16),
        preferred_element_type=jnp.float32)

    if acc:
        @pl.when(d == pl.num_programs(2) - 1)
        def _():
            o_ref[...] = acc_ref[...].astype(o_ref.dtype)


def _gramian_impl(x, a):
    """z = x @ a.T @ a with x:(M, K=n_model), a:(N=n_data, K) bf16 -> (M, K)."""
    m, k = x.shape
    n, k2 = a.shape
    assert k == k2
    tm = _tile(m, 256, _SUBLANE)
    td = _tile(n, 512, _SUBLANE)      # reduction tile over n_data rows of A
    tko = _tile(k, 1024, _LANE)       # output-column tile (parallel axis)
    single_slice = tko == k
    grid = (m // tm, k // tko, n // td)
    out_f32 = x.dtype == jnp.float32
    scratch = [] if out_f32 else [pltpu.VMEM((tm, tko), jnp.float32)]

    in_specs = [
        pl.BlockSpec((tm, k), lambda i, jo, d: (i, 0)),
        pl.BlockSpec((td, k), lambda i, jo, d: (d, 0)),
    ]
    operands = [x, a]
    if not single_slice:
        in_specs.append(pl.BlockSpec((td, tko), lambda i, jo, d: (d, jo)))
        operands.append(a)

    blk = (tm * k * x.dtype.itemsize + td * k * a.dtype.itemsize
           + (0 if single_slice else td * tko * a.dtype.itemsize)
           + tm * tko * x.dtype.itemsize)
    a_reads = (k // tko) + (0 if single_slice else 1)
    return pl.pallas_call(
        functools.partial(_gramian_kernel, single_slice=single_slice),
        out_shape=jax.ShapeDtypeStruct((m, k), x.dtype),
        grid=grid,
        in_specs=in_specs,
        out_specs=pl.BlockSpec((tm, tko), lambda i, jo, d: (i, jo)),
        scratch_shapes=scratch,
        compiler_params=pltpu.CompilerParams(
            dimension_semantics=("parallel", "parallel", "arbitrary"),
            vmem_limit_bytes=_vmem_limit(blk, 0 if out_f32 else tm * tko * 4),
        ),
        cost_estimate=pl.CostEstimate(
            flops=2 * m * n * k * (k // tko) + 2 * m * n * k,
            transcendentals=0,
            bytes_accessed=(n * k * a.dtype.itemsize * a_reads * (m // tm)
                            + m * k * x.dtype.itemsize        # x (resident per i)
                            + m * k * x.dtype.itemsize),      # output
        ),
    )(*operands)


_forward = jax.jit(_forward_impl)
_adjoint = jax.jit(_adjoint_impl)
_gramian = jax.jit(_gramian_impl)


class LinearOperator:
    """Concrete dense instantiation of the abstract seismic LinearOperator.

    A is stored in bf16 (MXU accumulates in f32): halves HBM traffic on the
    bandwidth-bound small-batch path and doubles MXU throughput when
    compute-bound on v6e/v7x.
    """

    def __init__(self, n_data, n_model, seed=0):
        key = jax.random.PRNGKey(seed)
        a = jax.random.normal(key, (n_data, n_model), dtype=jnp.float32) * 0.1
        # TODO(synk): fp8 storage is an option on v7x only (no int MXU path),
        # after a precision study.
        self.A = a.astype(jnp.bfloat16)

    def forward(self, x):
        # y = A x   : (batch, n_model) -> (batch, n_data); A consumed untransposed.
        return _forward(x, self.A)

    def adjoint(self, y):
        # z = A^T y : (batch, n_data) -> (batch, n_model)
        return _adjoint(y, self.A)

    def gramian(self, x):
        # Same semantics as the base class adjoint(forward(x)), fused into one
        # kernel so the intermediate never touches HBM.
        return _gramian(x, self.A)


if __name__ == "__main__":
    batch, n_model, n_data = 8, 128, 128

    key = jax.random.PRNGKey(0)
    x = jax.random.normal(key, (batch, n_model), dtype=jnp.float32)

    op = LinearOperator(n_data=n_data, n_model=n_model, seed=0)

    y = op.forward(x)
    z = op.adjoint(y)
    g = op.gramian(x)
    jax.block_until_ready((y, z, g))

    # Reference mirroring the kernels' bf16-operand / f32-accumulate math.
    a32 = op.A.astype(jnp.float32)                       # exact (A stored bf16)
    xb = x.astype(jnp.bfloat16).astype(jnp.float32)      # matches in-kernel cast
    y_ref = xb @ a32.T
    z_ref = y.astype(jnp.bfloat16).astype(jnp.float32) @ a32
    g_ref = y_ref.astype(jnp.bfloat16).astype(jnp.float32) @ a32

    assert y.shape == (batch, n_data)
    assert z.shape == (batch, n_model)
    assert g.shape == (batch, n_model)
    assert jnp.allclose(y, y_ref, atol=1e-3, rtol=1e-3)
    assert jnp.allclose(z, z_ref, atol=1e-3, rtol=1e-3)
    assert jnp.allclose(g, g_ref, atol=1e-3, rtol=1e-3)
    # Fused gramian must agree with the unfused adjoint(forward(x)) path.
    assert jnp.allclose(g, z, atol=1e-3, rtol=1e-3)

    print("KERNEL_OK")
</pallas_src>

<mosaic_0001>
module attributes {stable_mosaic.version = 11 : i64} {
  func.func @_matmul_kernel(%arg0: i32, %arg1: i32, %arg2: i32, %arg3: memref<8x128xf32, #tpu.memory_space<vmem>>, %arg4: memref<128x128xbf16, #tpu.memory_space<vmem>>, %arg5: memref<8x128xf32, #tpu.memory_space<vmem>>) attributes {dimension_semantics = [#tpu.dimension_semantics<parallel>, #tpu.dimension_semantics<parallel>, #tpu.dimension_semantics<arbitrary>], iteration_bounds = array<i64: 1, 1, 1>, scalar_prefetch = 0 : i64, scratch_operands = 0 : i64, tpu.core_type = #tpu.core_type<tc>, window_params = [{transform_indices = @transform_0, window_bounds = array<i64: 8, 128>}, {transform_indices = @transform_1, window_bounds = array<i64: 128, 128>}, {transform_indices = @transform_2, window_bounds = array<i64: 8, 128>}]} {
    %c0_i32 = arith.constant 0 : i32
    %0 = arith.cmpi eq, %arg2, %c0_i32 : i32
    %1 = arith.extui %0 : i1 to i32
    %c0_i32_0 = arith.constant 0 : i32
    %2 = arith.cmpi ne, %1, %c0_i32_0 : i32
    scf.if %2 {
      %cst_8 = arith.constant 0.000000e+00 : f32
      %10 = vector.broadcast %cst_8 : f32 to vector<8x128xf32>
      %c0_9 = arith.constant 0 : index
      %c0_10 = arith.constant 0 : index
      %11 = vector.load %arg5[%c0_9, %c0_10] : memref<8x128xf32, #tpu.memory_space<vmem>>, vector<8x128xf32>
      tpu.vector_store %arg5[%c0_9, %c0_10], %10 {strides = array<i32>} : memref<8x128xf32, #tpu.memory_space<vmem>>, vector<8x128xf32>,
    } else {
    }
    %c0 = arith.constant 0 : index
    %c0_1 = arith.constant 0 : index
    %3 = vector.load %arg3[%c0, %c0_1] : memref<8x128xf32, #tpu.memory_space<vmem>>, vector<8x128xf32>
    %4 = arith.truncf %3 : vector<8x128xf32> to vector<8x128xbf16>
    %c0_2 = arith.constant 0 : index
    %c0_3 = arith.constant 0 : index
    %5 = vector.load %arg4[%c0_2, %c0_3] : memref<128x128xbf16, #tpu.memory_space<vmem>>, vector<128x128xbf16>
    %c0_4 = arith.constant 0 : index
    %c0_5 = arith.constant 0 : index
    %6 = vector.load %arg5[%c0_4, %c0_5] : memref<8x128xf32, #tpu.memory_space<vmem>>, vector<8x128xf32>
    %cst = arith.constant dense<0.000000e+00> : vector<8x128xf32>
    %7 = tpu.matmul %4, %5, %cst {dimension_numbers = #tpu.dot_dimension_numbers<[1], [1], [0], [0], [0, 0, 1, 0], [], []>} : vector<8x128xbf16>, vector<128x128xbf16>, vector<8x128xf32> -> vector<8x128xf32>
    %8 = arith.addf %6, %7 : vector<8x128xf32>
    %c0_6 = arith.constant 0 : index
    %c0_7 = arith.constant 0 : index
    %9 = vector.load %arg5[%c0_6, %c0_7] : memref<8x128xf32, #tpu.memory_space<vmem>>, vector<8x128xf32>
    tpu.vector_store %arg5[%c0_6, %c0_7], %8 {strides = array<i32>} : memref<8x128xf32, #tpu.memory_space<vmem>>, vector<8x128xf32>,
    return
  }
  func.func @transform_0(%arg0: i32, %arg1: i32, %arg2: i32) -> (i32, i32) {
    %c0_i32 = arith.constant 0 : i32
    return %arg0, %arg2 : i32, i32
  }
  func.func @transform_1(%arg0: i32, %arg1: i32, %arg2: i32) -> (i32, i32) {
    %c0_i32 = arith.constant 0 : i32
    return %arg1, %arg2 : i32, i32
  }
  func.func @transform_2(%arg0: i32, %arg1: i32, %arg2: i32) -> (i32, i32) {
    %c0_i32 = arith.constant 0 : i32
    return %arg0, %arg1 : i32, i32
  }
}

</mosaic_0001>

<llo_original>
// kernel: _forward_impl.1
$region0: #{_forward_impl.1}
  #allocation0 [shape = 'u32[]', space=smem, size = 0x4, offset = 0x4, fixed_abs, tag = 'smem constant byte address 0x4 - core index']
  #allocation1 [shape = 'u32[72,128]{1,0:T(1,128)}', space=vmem, size = 0x9000, scoped, tag = 'internal scratch']
  %s0 = inlined_call_operand.hbm [shape: f32[8,128], index: 0, kind: input, shape index: {}]
  %s1 = inlined_call_operand.hbm [shape: bf16[128,128], index: 1, kind: input, shape index: {}]
  %s2 = inlined_call_operand.hbm [shape: f32[8,128], index: 2, kind: output, shape index: {}]
  %s3 = sld [smem:[#allocation0]]
  $region30: #{_forward_impl.1} parent=0
    _
  %s5 = ssub.s32 1, %s3
  %s6 = scalar_select 0, %s5, %s3
  $region1: #{_forward_impl.1} parent=0
    #allocation2 [shape = 'u8[4096]{0}', space=vmem, size = 0x1000, scoped, tag = 'input window, operand 0, single buffered']
    #allocation3 [shape = 's32[1]{0}', space=sflag, size = 0x4, scoped, tag = 'scoped memory for _forward_impl.1']
    #allocation4 [shape = 's32[1]{0}', space=sflag, size = 0x4, scoped, tag = 'scoped memory for _forward_impl.1']
    #allocation5 [shape = 'u8[32768]{0}', space=vmem, size = 0x8000, scoped, tag = 'input window, operand 1, single buffered']
    #allocation6 [shape = 's32[1]{0}', space=sflag, size = 0x4, scoped, tag = 'scoped memory for _forward_impl.1']
    #allocation7 [shape = 'u8[4096]{0}', space=vmem, size = 0x1000, scoped, tag = 'output window, operand 0, single buffered']
    %7 = vsyncpa [#allocation3], 0
    %8 = vsyncpa [#allocation6], 0
    %9 = vsyncpa [#allocation4], 0
    // Predicated region
    $region2: #{_forward_impl.1} parent=1 // pred_check
      _
    $region3: #{_forward_impl.1} parent=1 // pred_check_branch
      %11 = sbr.rel (0) target = $region5
    $region4: #{_forward_impl.1} parent=1 // pred_region
      %13 = vsyncadd [#allocation3], 0
      %s15 = sshll.u32 %s0, 4
      %s16 = int_to_ptr.hbm [resolvable:$true] %s15
      %s17 = sshll.u32 [#allocation2], 4
      %s18 = int_to_ptr.vmem [resolvable:$true] %s17
      %20 = dma.hbm_to_vmem [thread:$0]  %s16, 128, %s18, [#allocation3]
    $region5: #{_forward_impl.1} parent=1 // pred_fallthru
      _
    // Predicated region
    $region6: #{_forward_impl.1} parent=1 // pred_check
      _
    $region7: #{_forward_impl.1} parent=1 // pred_check_branch
      %22 = sbr.rel (0) target = $region9
    $region8: #{_forward_impl.1} parent=1 // pred_region
      %24 = vsyncadd [#allocation6], 0
      %s25 = sshll.u32 %s1, 4
      %s26 = int_to_ptr.hbm [resolvable:$true] %s25
      %s27 = sshll.u32 [#allocation5], 4
      %s28 = int_to_ptr.vmem [resolvable:$true] %s27
      %33 = dma.hbm_to_vmem [thread:$0]  %s26, 1024, %s28, [#allocation6], 64, 64, 4
    $region9: #{_forward_impl.1} parent=1 // pred_fallthru
      _
    // Predicated region
    $region10: #{_forward_impl.1} parent=1 // pred_check
      _
    $region11: #{_forward_impl.1} parent=1 // pred_check_branch
      %35 = sbr.rel (0) target = $region13
    $region12: #{_forward_impl.1} parent=1 // pred_region
      %37 = dma.done [#allocation3], 128
    $region13: #{_forward_impl.1} parent=1 // pred_fallthru
      _
    // Predicated region
    $region14: #{_forward_impl.1} parent=1 // pred_check
      _
    $region15: #{_forward_impl.1} parent=1 // pred_check_branch
      %39 = sbr.rel (0) target = $region17
    $region16: #{_forward_impl.1} parent=1 // pred_region
      %41 = dma.done [#allocation6], 1024
    $region17: #{_forward_impl.1} parent=1 // pred_fallthru
      _
    %p42 = scmp.eq.s32.totalorder 0, 0
    // Predicated region
    $region18: #{_forward_impl.1} parent=1 // pred_check
      %p43 = pneg %p42
    $region19: #{_forward_impl.1} parent=1 // pred_check_branch
      %45 = sbr.rel (%p43) target = $region21
    $region20: #{_forward_impl.1} parent=1 // pred_region
      %46 = vst [vmem:[#allocation7] sm:$0xff] 0.0
    $region21: #{_forward_impl.1} parent=1 // pred_fallthru
      _
    %v47 = vld [vmem:[#allocation2] sm:$0xff]
    %v48 = vpack.c.bf16 %v47, %v47
    %v49 = vld [vmem:[#allocation5] sm:$0xf]
    %v50 = vld [vmem:[#allocation5 + $0x4] sm:$0xf]
    %v51 = vld [vmem:[#allocation5 + $0x8] sm:$0xf]
    %v52 = vld [vmem:[#allocation5 + $0xc] sm:$0xf]
    %v53 = vld [vmem:[#allocation5 + $0x10] sm:$0xf]
    %v54 = vld [vmem:[#allocation5 + $0x14] sm:$0xf]
    %v55 = vld [vmem:[#allocation5 + $0x18] sm:$0xf]
    %v56 = vld [vmem:[#allocation5 + $0x1c] sm:$0xf]
    %v57 = vld [vmem:[#allocation5 + $0x20] sm:$0xf]
    %v58 = vld [vmem:[#allocation5 + $0x24] sm:$0xf]
    %v59 = vld [vmem:[#allocation5 + $0x28] sm:$0xf]
    %v60 = vld [vmem:[#allocation5 + $0x2c] sm:$0xf]
    %v61 = vld [vmem:[#allocation5 + $0x30] sm:$0xf]
    %v62 = vld [vmem:[#allocation5 + $0x34] sm:$0xf]
    %v63 = vld [vmem:[#allocation5 + $0x38] sm:$0xf]
    %v64 = vld [vmem:[#allocation5 + $0x3c] sm:$0xf]
    %v65 = vld [vmem:[#allocation7] sm:$0xff]
    %v82 = vunpack.c.l.b16 %v49
    %v83 = vunpack.c.l.b16 %v50
    %v84 = vunpack.c.l.b16 %v51
    %v85 = vunpack.c.l.b16 %v52
    %v86 = vunpack.c.l.b16 %v53
    %v87 = vunpack.c.l.b16 %v54
    %v88 = vunpack.c.l.b16 %v55
    %v89 = vunpack.c.l.b16 %v56
    %v90 = vunpack.c.l.b16 %v57
    %v91 = vunpack.c.l.b16 %v58
    %v92 = vunpack.c.l.b16 %v59
    %v93 = vunpack.c.l.b16 %v60
    %v94 = vunpack.c.l.b16 %v61
    %v95 = vunpack.c.l.b16 %v62
    %v96 = vunpack.c.l.b16 %v63
    %v97 = vunpack.c.l.b16 %v64
    %v98 = vpack.c.b16 %v83, %v82
    %v99 = vpack.c.b16 %v85, %v84
    %v100 = vpack.c.b16 %v87, %v86
    %v101 = vpack.c.b16 %v89, %v88
    %v102 = vpack.c.b16 %v91, %v90
    %v103 = vpack.c.b16 %v93, %v92
    %v104 = vpack.c.b16 %v95, %v94
    %v105 = vpack.c.b16 %v97, %v96
    %114 = vmatpush.bf16.xpose.msra.mxu0 %v105
    %115 = vmatpush.bf16.xpose.msra.mxu0 %v104
    %116 = vmatpush.bf16.xpose.msra.mxu0 %v103
    %117 = vmatpush.bf16.xpose.msra.mxu0 %v102
    %118 = vmatpush.bf16.xpose.msra.mxu0 %v101
    %119 = vmatpush.bf16.xpose.msra.mxu0 %v100
    %120 = vmatpush.bf16.xpose.msra.mxu0 %v99
    %121 = vmatpush.bf16.xpose.msra.mxu0 %v98
    %122 = vmatmul.bf16.gmra.mxu0 %v48
    %v123 = vpop.f32.mrf.mxu0
    %v124 = vadd.f32 0.0, %v123
    %v125 = vpop.f32.mrf.mxu0
    %126 = vdwg.mxu0
    %v127 = vadd.f32 %v65, %v124
    %128 = vst [vmem:[#allocation7] sm:$0xff] %v127
    // Predicated region
    $region22: #{_forward_impl.1} parent=1 // pred_check
      _
    $region23: #{_forward_impl.1} parent=1 // pred_check_branch
      %130 = sbr.rel (0) target = $region25
    $region24: #{_forward_impl.1} parent=1 // pred_region
      %132 = vsyncadd [#allocation4], 0
      %s134 = sshll.u32 [#allocation7], 4
      %s135 = int_to_ptr.vmem [resolvable:$true] %s134
      %s136 = sshll.u32 %s2, 4
      %s137 = int_to_ptr.hbm [resolvable:$true] %s136
      %139 = dma.vmem_to_hbm [thread:$0]  %s135, 128, %s137, [#allocation4]
    $region25: #{_forward_impl.1} parent=1 // pred_fallthru
      _
    // Predicated region
    $region26: #{_forward_impl.1} parent=1 // pred_check
      _
    $region27: #{_forward_impl.1} parent=1 // pred_check_branch
      %141 = sbr.rel (0) target = $region29
    $region28: #{_forward_impl.1} parent=1 // pred_region
      %143 = dma.done [#allocation4], 128
    $region29: #{_forward_impl.1} parent=1 // pred_fallthru
      _
    %144 = vsyncpa [#allocation3], 1
    %145 = vsyncpa [#allocation6], 1
    %146 = vsyncpa [#allocation4], 1

</llo_original>
